<compile_context>
chip_gen: v6e
topology: v6e:2x2x1
jax: 0.10.0
libtpu: 0.0.40
codegen_flags: <defaults>
</compile_context>

<pallas_src>
import functools

import jax
import jax.numpy as jnp
from jax.experimental import pallas as pl
from jax.experimental.pallas import tpu as pltpu


def _round_up(x, m):
    return (x + m - 1) // m * m


def _mlp_kernel(x_ref, w1_ref, b1_ref, w2_ref, b2_ref, w3_ref, b3_ref, o_ref):
    # Layer 1: Linear (bf16 MXU inputs, f32 accumulation) + bias + ReLU.
    h1 = jnp.dot(x_ref[...], w1_ref[...], preferred_element_type=jnp.float32)
    h1 = jnp.maximum(h1 + b1_ref[...], 0.0).astype(w2_ref.dtype)
    # Layer 2: Linear + ReLU.
    h2 = jnp.dot(h1, w2_ref[...], preferred_element_type=jnp.float32)
    h2 = jnp.maximum(h2 + b2_ref[...], 0.0).astype(w3_ref.dtype)
    # Layer 3: Linear (logits; out dim padded to a lane-dense multiple of 128).
    out = jnp.dot(h2, w3_ref[...], preferred_element_type=jnp.float32)
    o_ref[...] = (out + b3_ref[...]).astype(o_ref.dtype)


@functools.partial(jax.jit, static_argnames=("block_b",))
def discriminator_forward(x, params, block_b=256):
    """x: (B, in_size).  Returns (B,) if out_size == 1, else (B, out_size)."""
    w1, b1, w2, b2, w3, b3 = params
    B, in_size = x.shape
    h = w1.shape[1]
    out_size = w3.shape[1]

    # --- batch tile selection -------------------------------------------
    #  * multiple of 8 (sublane granularity), capped at block_b
    #  * prefer >= 2 grid steps so "parallel" can use both v7x TensorCores
    bb = min(block_b, max(8, _round_up(-(-B // 2), 8)))
    B_pad = _round_up(B, bb)
    grid = (B_pad // bb,)

    # --- lane-dense output padding ----------------------------------------
    out_pad = _round_up(out_size, 128)

    # --- operand preparation (bf16 MXU inputs, f32 biases) -----------------
    x_p = jnp.pad(x, ((0, B_pad - B), (0, 0))) if B_pad != B else x
    x_bf = x_p.astype(jnp.bfloat16)
    w1_bf = w1.astype(jnp.bfloat16)
    w2_bf = w2.astype(jnp.bfloat16)
    w3_bf = w3.astype(jnp.bfloat16)
    b1_f = b1.astype(jnp.float32)
    b2_f = b2.astype(jnp.float32)
    b3_f = b3.astype(jnp.float32)
    if out_pad != out_size:
        w3_bf = jnp.pad(w3_bf, ((0, 0), (0, out_pad - out_size)))
        b3_f = jnp.pad(b3_f, ((0, 0), (0, out_pad - out_size)))

    # TODO(synk): add a K-reduction grid axis ("arbitrary", last) with an f32
    # VMEM accumulator if in_size/h grow beyond ~4096 so weight tiles keep
    # fitting v7x's 64 MiB VMEM without shrinking the batch tile.
    out = pl.pallas_call(
        _mlp_kernel,
        out_shape=jax.ShapeDtypeStruct((B_pad, out_pad), jnp.float32),
        grid_spec=pltpu.PrefetchScalarGridSpec(
            num_scalar_prefetch=0,
            grid=grid,
            in_specs=[
                pl.BlockSpec((bb, in_size), lambda i: (i, 0)),   # x tile
                pl.BlockSpec((in_size, h), lambda i: (0, 0)),    # W1 (resident)
                pl.BlockSpec((1, h), lambda i: (0, 0)),          # b1
                pl.BlockSpec((h, h), lambda i: (0, 0)),          # W2 (resident)
                pl.BlockSpec((1, h), lambda i: (0, 0)),          # b2
                pl.BlockSpec((h, out_pad), lambda i: (0, 0)),    # W3 (resident)
                pl.BlockSpec((1, out_pad), lambda i: (0, 0)),    # b3
            ],
            out_specs=pl.BlockSpec((bb, out_pad), lambda i: (i, 0)),
        ),
        compiler_params=pltpu.CompilerParams(
            dimension_semantics=("parallel",),
            vmem_limit_bytes=56 * 1024 * 1024,
        ),
    )(x_bf, w1_bf, b1_f, w2_bf, b2_f, w3_bf, b3_f)

    out = out[:B, :out_size]
    if out_size == 1:
        out = jnp.squeeze(out, axis=1)   # matches torch .squeeze(1)
    return out


def init_discriminator_params(key, in_size, h, out_size, dtype=jnp.float32):
    """Mimics nn.Linear's U(-1/sqrt(fan_in), 1/sqrt(fan_in)) init.
    Weights stored as (in_features, out_features)."""
    ks = jax.random.split(key, 6)

    def linear(kw, kb, fan_in, fan_out):
        bound = 1.0 / jnp.sqrt(fan_in)
        w = jax.random.uniform(kw, (fan_in, fan_out), dtype, -bound, bound)
        b = jax.random.uniform(kb, (1, fan_out), dtype, -bound, bound)
        return w, b

    w1, b1 = linear(ks[0], ks[1], in_size, h)
    w2, b2 = linear(ks[2], ks[3], h, h)
    w3, b3 = linear(ks[4], ks[5], h, out_size)
    return (w1, b1, w2, b2, w3, b3)


def _reference_forward(x, params):
    """Pure-JAX reference matching the kernel arithmetic (bf16 matmul inputs,
    f32 accumulation, f32 bias/ReLU)."""
    w1, b1, w2, b2, w3, b3 = params
    bf = jnp.bfloat16
    y = jnp.maximum(
        jnp.dot(x.astype(bf), w1.astype(bf), preferred_element_type=jnp.float32) + b1, 0.0)
    y = jnp.maximum(
        jnp.dot(y.astype(bf), w2.astype(bf), preferred_element_type=jnp.float32) + b2, 0.0)
    y = jnp.dot(y.astype(bf), w3.astype(bf), preferred_element_type=jnp.float32) + b3
    if y.shape[1] == 1:
        y = jnp.squeeze(y, axis=1)
    return y


if __name__ == "__main__":
    # Small shapes consistent with the module (defaults are in=2048, h=2048, out=1).
    B, IN_SIZE, H, OUT_SIZE = 8, 32, 32, 1

    key = jax.random.PRNGKey(0)
    kx, kp = jax.random.split(key)
    x = jax.random.normal(kx, (B, IN_SIZE), dtype=jnp.float32)
    params = init_discriminator_params(kp, IN_SIZE, H, OUT_SIZE)

    out = jax.block_until_ready(discriminator_forward(x, params))
    ref = _reference_forward(x, params)
    assert out.shape == (B,), out.shape
    assert jnp.allclose(out, ref, atol=1e-2, rtol=1e-2), "mismatch vs reference"

    # Ragged batch: exercises the zero-pad path (the old hard assert is gone).
    out5 = jax.block_until_ready(discriminator_forward(x[:5], params))
    assert out5.shape == (5,), out5.shape
    assert jnp.allclose(out5, ref[:5], atol=1e-2, rtol=1e-2), "mismatch (ragged batch)"

    print("KERNEL_OK")
</pallas_src>

<mosaic_0001>
module attributes {stable_mosaic.version = 11 : i64} {
  func.func @_mlp_kernel(%arg0: i32, %arg1: memref<8x32xbf16, #tpu.memory_space<vmem>>, %arg2: memref<32x32xbf16, #tpu.memory_space<vmem>>, %arg3: memref<1x32xf32, #tpu.memory_space<vmem>>, %arg4: memref<32x32xbf16, #tpu.memory_space<vmem>>, %arg5: memref<1x32xf32, #tpu.memory_space<vmem>>, %arg6: memref<32x128xbf16, #tpu.memory_space<vmem>>, %arg7: memref<1x128xf32, #tpu.memory_space<vmem>>, %arg8: memref<8x128xf32, #tpu.memory_space<vmem>>) attributes {dimension_semantics = [#tpu.dimension_semantics<parallel>], iteration_bounds = array<i64: 1>, scalar_prefetch = 0 : i64, scratch_operands = 0 : i64, tpu.core_type = #tpu.core_type<tc>, window_params = [{transform_indices = @transform_0, window_bounds = array<i64: 8, 32>}, {pipeline_mode = #tpu.pipeline_mode<synchronous>, transform_indices = @transform_1, window_bounds = array<i64: 32, 32>}, {pipeline_mode = #tpu.pipeline_mode<synchronous>, transform_indices = @transform_2, window_bounds = array<i64: 1, 32>}, {pipeline_mode = #tpu.pipeline_mode<synchronous>, transform_indices = @transform_3, window_bounds = array<i64: 32, 32>}, {pipeline_mode = #tpu.pipeline_mode<synchronous>, transform_indices = @transform_4, window_bounds = array<i64: 1, 32>}, {pipeline_mode = #tpu.pipeline_mode<synchronous>, transform_indices = @transform_5, window_bounds = array<i64: 32, 128>}, {pipeline_mode = #tpu.pipeline_mode<synchronous>, transform_indices = @transform_6, window_bounds = array<i64: 1, 128>}, {transform_indices = @transform_7, window_bounds = array<i64: 8, 128>}]} {
    %c0 = arith.constant 0 : index
    %c0_0 = arith.constant 0 : index
    %0 = vector.load %arg1[%c0, %c0_0] : memref<8x32xbf16, #tpu.memory_space<vmem>>, vector<8x32xbf16>
    %c0_1 = arith.constant 0 : index
    %c0_2 = arith.constant 0 : index
    %1 = vector.load %arg2[%c0_1, %c0_2] : memref<32x32xbf16, #tpu.memory_space<vmem>>, vector<32x32xbf16>
    %cst = arith.constant dense<0.000000e+00> : vector<8x32xf32>
    %2 = tpu.matmul %0, %1, %cst {dimension_numbers = #tpu.dot_dimension_numbers<[1], [0], [0], [1], [0, 0, 1, 1], [], []>} : vector<8x32xbf16>, vector<32x32xbf16>, vector<8x32xf32> -> vector<8x32xf32>
    %c0_3 = arith.constant 0 : index
    %c0_4 = arith.constant 0 : index
    %3 = vector.load %arg3[%c0_3, %c0_4] : memref<1x32xf32, #tpu.memory_space<vmem>>, vector<1x32xf32>
    %4 = vector.broadcast %3 : vector<1x32xf32> to vector<8x32xf32>
    %5 = arith.addf %2, %4 : vector<8x32xf32>
    %cst_5 = arith.constant 0.000000e+00 : f32
    %6 = vector.broadcast %cst_5 : f32 to vector<8x32xf32>
    %7 = arith.maximumf %5, %6 : vector<8x32xf32>
    %8 = arith.truncf %7 : vector<8x32xf32> to vector<8x32xbf16>
    %c0_6 = arith.constant 0 : index
    %c0_7 = arith.constant 0 : index
    %9 = vector.load %arg4[%c0_6, %c0_7] : memref<32x32xbf16, #tpu.memory_space<vmem>>, vector<32x32xbf16>
    %cst_8 = arith.constant dense<0.000000e+00> : vector<8x32xf32>
    %10 = tpu.matmul %8, %9, %cst_8 {dimension_numbers = #tpu.dot_dimension_numbers<[1], [0], [0], [1], [0, 0, 1, 1], [], []>} : vector<8x32xbf16>, vector<32x32xbf16>, vector<8x32xf32> -> vector<8x32xf32>
    %c0_9 = arith.constant 0 : index
    %c0_10 = arith.constant 0 : index
    %11 = vector.load %arg5[%c0_9, %c0_10] : memref<1x32xf32, #tpu.memory_space<vmem>>, vector<1x32xf32>
    %12 = vector.broadcast %11 : vector<1x32xf32> to vector<8x32xf32>
    %13 = arith.addf %10, %12 : vector<8x32xf32>
    %cst_11 = arith.constant 0.000000e+00 : f32
    %14 = vector.broadcast %cst_11 : f32 to vector<8x32xf32>
    %15 = arith.maximumf %13, %14 : vector<8x32xf32>
    %16 = arith.truncf %15 : vector<8x32xf32> to vector<8x32xbf16>
    %c0_12 = arith.constant 0 : index
    %c0_13 = arith.constant 0 : index
    %17 = vector.load %arg6[%c0_12, %c0_13] : memref<32x128xbf16, #tpu.memory_space<vmem>>, vector<32x128xbf16>
    %cst_14 = arith.constant dense<0.000000e+00> : vector<8x128xf32>
    %18 = tpu.matmul %16, %17, %cst_14 {dimension_numbers = #tpu.dot_dimension_numbers<[1], [0], [0], [1], [0, 0, 1, 1], [], []>} : vector<8x32xbf16>, vector<32x128xbf16>, vector<8x128xf32> -> vector<8x128xf32>
    %c0_15 = arith.constant 0 : index
    %c0_16 = arith.constant 0 : index
    %19 = vector.load %arg7[%c0_15, %c0_16] : memref<1x128xf32, #tpu.memory_space<vmem>>, vector<1x128xf32>
    %20 = vector.broadcast %19 : vector<1x128xf32> to vector<8x128xf32>
    %21 = arith.addf %18, %20 : vector<8x128xf32>
    %c0_17 = arith.constant 0 : index
    %c0_18 = arith.constant 0 : index
    %22 = vector.load %arg8[%c0_17, %c0_18] : memref<8x128xf32, #tpu.memory_space<vmem>>, vector<8x128xf32>
    tpu.vector_store %arg8[%c0_17, %c0_18], %21 {strides = array<i32>} : memref<8x128xf32, #tpu.memory_space<vmem>>, vector<8x128xf32>,
    return
  }
  func.func @transform_0(%arg0: i32) -> (i32, i32) {
    %c0_i32 = arith.constant 0 : i32
    %c0_i32_0 = arith.constant 0 : i32
    return %arg0, %c0_i32 : i32, i32
  }
  func.func @transform_1(%arg0: i32) -> (i32, i32) {
    %c0_i32 = arith.constant 0 : i32
    %c0_i32_0 = arith.constant 0 : i32
    %c0_i32_1 = arith.constant 0 : i32
    return %c0_i32, %c0_i32_0 : i32, i32
  }
  func.func @transform_2(%arg0: i32) -> (i32, i32) {
    %c0_i32 = arith.constant 0 : i32
    %c0_i32_0 = arith.constant 0 : i32
    %c0_i32_1 = arith.constant 0 : i32
    return %c0_i32, %c0_i32_0 : i32, i32
  }
  func.func @transform_3(%arg0: i32) -> (i32, i32) {
    %c0_i32 = arith.constant 0 : i32
    %c0_i32_0 = arith.constant 0 : i32
    %c0_i32_1 = arith.constant 0 : i32
    return %c0_i32, %c0_i32_0 : i32, i32
  }
  func.func @transform_4(%arg0: i32) -> (i32, i32) {
    %c0_i32 = arith.constant 0 : i32
    %c0_i32_0 = arith.constant 0 : i32
    %c0_i32_1 = arith.constant 0 : i32
    return %c0_i32, %c0_i32_0 : i32, i32
  }
  func.func @transform_5(%arg0: i32) -> (i32, i32) {
    %c0_i32 = arith.constant 0 : i32
    %c0_i32_0 = arith.constant 0 : i32
    %c0_i32_1 = arith.constant 0 : i32
    return %c0_i32, %c0_i32_0 : i32, i32
  }
  func.func @transform_6(%arg0: i32) -> (i32, i32) {
    %c0_i32 = arith.constant 0 : i32
    %c0_i32_0 = arith.constant 0 : i32
    %c0_i32_1 = arith.constant 0 : i32
    return %c0_i32, %c0_i32_0 : i32, i32
  }
  func.func @transform_7(%arg0: i32) -> (i32, i32) {
    %c0_i32 = arith.constant 0 : i32
    %c0_i32_0 = arith.constant 0 : i32
    return %arg0, %c0_i32 : i32, i32
  }
}

</mosaic_0001>

<llo_original>
// kernel: discriminator_forward.1
$region0: #{discriminator_forward.1}
  #allocation0 [shape = 'u32[]', space=smem, size = 0x4, offset = 0x4, fixed_abs, tag = 'smem constant byte address 0x4 - core index']
  #allocation1 [shape = 'u32[144,128]{1,0:T(1,128)}', space=vmem, size = 0x12000, scoped, tag = 'internal scratch']
  %s0 = inlined_call_operand.vmem [shape: bf16[8,32], index: 0, kind: input, shape index: {}]
  %s1 = inlined_call_operand.vmem [shape: bf16[32,32], index: 1, kind: input, shape index: {}]
  %s2 = inlined_call_operand.vmem [shape: f32[1,32], index: 2, kind: input, shape index: {}]
  %s3 = inlined_call_operand.vmem [shape: bf16[32,32], index: 3, kind: input, shape index: {}]
  %s4 = inlined_call_operand.vmem [shape: f32[1,32], index: 4, kind: input, shape index: {}]
  %s5 = inlined_call_operand.vmem [shape: bf16[32,128], index: 5, kind: input, shape index: {}]
  %s6 = inlined_call_operand.vmem [shape: f32[1,128], index: 6, kind: input, shape index: {}]
  %s7 = inlined_call_operand.vmem [shape: f32[8,128], index: 7, kind: output, shape index: {}]
  %s8 = sld [smem:[#allocation0]]
  $region38: #{discriminator_forward.1} parent=0
    _
  %s10 = ssub.s32 1, %s8
  %s11 = scalar_select 0, %s10, %s8
  // Predicated region
  $region2: #{discriminator_forward.1} parent=0 // pred_check
    _
  $region3: #{discriminator_forward.1} parent=0 // pred_check_branch
    %13 = sbr.rel (0) target = $region5
  $region4: #{discriminator_forward.1} parent=0 // pred_region
    _
  $region5: #{discriminator_forward.1} parent=0 // pred_fallthru
    _
  // Predicated region
  $region6: #{discriminator_forward.1} parent=0 // pred_check
    _
  $region7: #{discriminator_forward.1} parent=0 // pred_check_branch
    %15 = sbr.rel (0) target = $region9
  $region8: #{discriminator_forward.1} parent=0 // pred_region
    _
  $region9: #{discriminator_forward.1} parent=0 // pred_fallthru
    _
  // Predicated region
  $region10: #{discriminator_forward.1} parent=0 // pred_check
    _
  $region11: #{discriminator_forward.1} parent=0 // pred_check_branch
    %17 = sbr.rel (0) target = $region13
  $region12: #{discriminator_forward.1} parent=0 // pred_region
    _
  $region13: #{discriminator_forward.1} parent=0 // pred_fallthru
    _
  // Predicated region
  $region14: #{discriminator_forward.1} parent=0 // pred_check
    _
  $region15: #{discriminator_forward.1} parent=0 // pred_check_branch
    %19 = sbr.rel (0) target = $region17
  $region16: #{discriminator_forward.1} parent=0 // pred_region
    _
  $region17: #{discriminator_forward.1} parent=0 // pred_fallthru
    _
  // Predicated region
  $region18: #{discriminator_forward.1} parent=0 // pred_check
    _
  $region19: #{discriminator_forward.1} parent=0 // pred_check_branch
    %21 = sbr.rel (0) target = $region21
  $region20: #{discriminator_forward.1} parent=0 // pred_region
    _
  $region21: #{discriminator_forward.1} parent=0 // pred_fallthru
    _
  // Predicated region
  $region22: #{discriminator_forward.1} parent=0 // pred_check
    _
  $region23: #{discriminator_forward.1} parent=0 // pred_check_branch
    %23 = sbr.rel (0) target = $region25
  $region24: #{discriminator_forward.1} parent=0 // pred_region
    _
  $region25: #{discriminator_forward.1} parent=0 // pred_fallthru
    _
  // Predicated region
  $region26: #{discriminator_forward.1} parent=0 // pred_check
    _
  $region27: #{discriminator_forward.1} parent=0 // pred_check_branch
    %25 = sbr.rel (0) target = $region29
  $region28: #{discriminator_forward.1} parent=0 // pred_region
    _
  $region29: #{discriminator_forward.1} parent=0 // pred_fallthru
    _
  %v27 = vld [vmem:[%s0] sm:$0xf]
  %v28 = vld [vmem:[%s1] sm:$0xf]
  %v29 = vld [vmem:[%s1 + $0x4] sm:$0xf]
  %v30 = vld [vmem:[%s1 + $0x8] sm:$0xf]
  %v31 = vld [vmem:[%s1 + $0xc] sm:$0xf]
  %v32 = vld [vmem:[%s2] sm:$0x1]
  %v34 = vlaneseq
  %v35 = vshrl.u32 %v34, 7
  %v36 = vsub.s32 0, %v35
  %v37 = vrot.slane %v32, %v36
  %v43 = vunpack.c.l.b16 %v28
  %v44 = vunpack.c.l.b16 %v29
  %v45 = vunpack.c.l.b16 %v30
  %v46 = vunpack.c.l.b16 %v31
  %v47 = vpack.c.b16 %v44, %v43
  %v48 = vpack.c.b16 %v46, %v45
  %vm51 = vcmask 261120
  %v53 = vsel %vm51, %v27, 0
  %55 = vmatprep.subr.bf16.mxu0 0
  %56 = vmatpush1.bf16.msra.mxu0 0
  %57 = vmatprep.subr.bf16.mxu0 0
  %58 = vmatpush1.bf16.msra.mxu0 0
  %59 = vmatprep.subr.bf16.mxu0 0
  %60 = vmatpush1.bf16.msra.mxu0 0
  %61 = vmatprep.subr.bf16.mxu0 0
  %62 = vmatpush1.bf16.msra.mxu0 0
  %63 = vmatprep.subr.bf16.mxu0 0
  %64 = vmatpush1.bf16.msra.mxu0 0
  %65 = vmatprep.subr.bf16.mxu0 0
  %66 = vmatpush1.bf16.msra.mxu0 0
  %67 = vmatprep.subr.bf16.mxu0 0
  %68 = vmatpush1.bf16.msra.mxu0 %v48
  %69 = vmatprep.subr.bf16.mxu0 0
  %70 = vmatpush1.bf16.msra.mxu0 %v47
  %71 = vmatprep.subr.bf16.mxu0 0
  %72 = vmatpush2.bf16.msra.mxu0 0
  %73 = vmatprep.subr.bf16.mxu0 0
  %74 = vmatpush2.bf16.msra.mxu0 0
  %75 = vmatprep.subr.bf16.mxu0 0
  %76 = vmatpush2.bf16.msra.mxu0 0
  %77 = vmatprep.subr.bf16.mxu0 0
  %78 = vmatpush2.bf16.msra.mxu0 0
  %79 = vmatprep.subr.bf16.mxu0 0
  %80 = vmatpush2.bf16.msra.mxu0 0
  %81 = vmatprep.subr.bf16.mxu0 0
  %82 = vmatpush2.bf16.msra.mxu0 0
  %83 = vmatprep.subr.bf16.mxu0 0
  %84 = vmatpush2.bf16.msra.mxu0 0
  %85 = vmatprep.subr.bf16.mxu0 0
  %86 = vmatpush2.bf16.msra.mxu0 0
  %87 = vmatprep.mubr.bf16.mxu0 0
  %88 = vmatmul.mubr.bf16.gmra.mxu0 %v53
  %v89 = vpop.f32.mrf.mxu0
  %v90 = vadd.f32 %v37, %v89
  %v91 = vpop.f32.mrf.mxu0
  %v92 = vpop.f32.mrf.mxu0
  %v93 = vpop.f32.mrf.mxu0
  %94 = vdwg.mxu0
  %v95 = vmax.f32 %v90, 0.0
  %v96 = vpack.c.bf16 %v95, %v95
  %v97 = vld [vmem:[%s3] sm:$0xf]
  %v98 = vld [vmem:[%s3 + $0x4] sm:$0xf]
  %v99 = vld [vmem:[%s3 + $0x8] sm:$0xf]
  %v100 = vld [vmem:[%s3 + $0xc] sm:$0xf]
  %v101 = vld [vmem:[%s4] sm:$0x1]
  %v103 = vlaneseq
  %v104 = vshrl.u32 %v103, 7
  %v105 = vsub.s32 0, %v104
  %v106 = vrot.slane %v101, %v105
  %v112 = vunpack.c.l.b16 %v97
  %v113 = vunpack.c.l.b16 %v98
  %v114 = vunpack.c.l.b16 %v99
  %v115 = vunpack.c.l.b16 %v100
  %v116 = vpack.c.b16 %v113, %v112
  %v117 = vpack.c.b16 %v115, %v114
  %v121 = vsel %vm51, %v96, 0
  %123 = vmatprep.subr.bf16.mxu0 0
  %124 = vmatpush1.bf16.msra.mxu0 0
  %125 = vmatprep.subr.bf16.mxu0 0
  %126 = vmatpush1.bf16.msra.mxu0 0
  %127 = vmatprep.subr.bf16.mxu0 0
  %128 = vmatpush1.bf16.msra.mxu0 0
  %129 = vmatprep.subr.bf16.mxu0 0
  %130 = vmatpush1.bf16.msra.mxu0 0
  %131 = vmatprep.subr.bf16.mxu0 0
  %132 = vmatpush1.bf16.msra.mxu0 0
  %133 = vmatprep.subr.bf16.mxu0 0
  %134 = vmatpush1.bf16.msra.mxu0 0
  %135 = vmatprep.subr.bf16.mxu0 0
  %136 = vmatpush1.bf16.msra.mxu0 %v117
  %137 = vmatprep.subr.bf16.mxu0 0
  %138 = vmatpush1.bf16.msra.mxu0 %v116
  %139 = vmatprep.subr.bf16.mxu0 0
  %140 = vmatpush2.bf16.msra.mxu0 0
  %141 = vmatprep.subr.bf16.mxu0 0
  %142 = vmatpush2.bf16.msra.mxu0 0
  %143 = vmatprep.subr.bf16.mxu0 0
  %144 = vmatpush2.bf16.msra.mxu0 0
  %145 = vmatprep.subr.bf16.mxu0 0
  %146 = vmatpush2.bf16.msra.mxu0 0
  %147 = vmatprep.subr.bf16.mxu0 0
  %148 = vmatpush2.bf16.msra.mxu0 0
  %149 = vmatprep.subr.bf16.mxu0 0
  %150 = vmatpush2.bf16.msra.mxu0 0
  %151 = vmatprep.subr.bf16.mxu0 0
  %152 = vmatpush2.bf16.msra.mxu0 0
  %153 = vmatprep.subr.bf16.mxu0 0
  %154 = vmatpush2.bf16.msra.mxu0 0
  %155 = vmatprep.mubr.bf16.mxu0 0
  %156 = vmatmul.mubr.bf16.gmra.mxu0 %v121
  %v157 = vpop.f32.mrf.mxu0
  %v158 = vadd.f32 %v106, %v157
  %v159 = vpop.f32.mrf.mxu0
  %v160 = vpop.f32.mrf.mxu0
  %v161 = vpop.f32.mrf.mxu0
  %162 = vdwg.mxu0
  %v163 = vmax.f32 %v158, 0.0
  %v164 = vpack.c.bf16 %v163, %v163
  %v165 = vld [vmem:[%s5] sm:$0xf]
  %v166 = vld [vmem:[%s5 + $0x4] sm:$0xf]
  %v167 = vld [vmem:[%s5 + $0x8] sm:$0xf]
  %v168 = vld [vmem:[%s5 + $0xc] sm:$0xf]
  %v169 = vld [vmem:[%s6] sm:$0x1]
  %v171 = vlaneseq
  %v172 = vshrl.u32 %v171, 7
  %v173 = vsub.s32 0, %v172
  %v174 = vrot.slane %v169, %v173
  %v180 = vunpack.c.l.b16 %v165
  %v181 = vunpack.c.l.b16 %v166
  %v182 = vunpack.c.l.b16 %v167
  %v183 = vunpack.c.l.b16 %v168
  %v184 = vpack.c.b16 %v181, %v180
  %v185 = vpack.c.b16 %v183, %v182
  %v189 = vsel %vm51, %v164, 0
  %191 = vmatprep.subr.bf16.mxu0 0
  %192 = vmatpush1.bf16.msra.mxu0 0
  %193 = vmatprep.subr.bf16.mxu0 0
  %194 = vmatpush1.bf16.msra.mxu0 0
  %195 = vmatprep.subr.bf16.mxu0 0
  %196 = vmatpush1.bf16.msra.mxu0 0
  %197 = vmatprep.subr.bf16.mxu0 0
  %198 = vmatpush1.bf16.msra.mxu0 0
  %199 = vmatprep.subr.bf16.mxu0 0
  %200 = vmatpush1.bf16.msra.mxu0 0
  %201 = vmatprep.subr.bf16.mxu0 0
  %202 = vmatpush1.bf16.msra.mxu0 0
  %203 = vmatprep.subr.bf16.mxu0 0
  %204 = vmatpush1.bf16.msra.mxu0 %v185
  %205 = vmatprep.subr.bf16.mxu0 0
  %206 = vmatpush1.bf16.msra.mxu0 %v184
  %207 = vmatprep.subr.bf16.mxu0 0
  %208 = vmatpush2.bf16.msra.mxu0 0
  %209 = vmatprep.subr.bf16.mxu0 0
  %210 = vmatpush2.bf16.msra.mxu0 0
  %211 = vmatprep.subr.bf16.mxu0 0
  %212 = vmatpush2.bf16.msra.mxu0 0
  %213 = vmatprep.subr.bf16.mxu0 0
  %214 = vmatpush2.bf16.msra.mxu0 0
  %215 = vmatprep.subr.bf16.mxu0 0
  %216 = vmatpush2.bf16.msra.mxu0 0
  %217 = vmatprep.subr.bf16.mxu0 0
  %218 = vmatpush2.bf16.msra.mxu0 0
  %219 = vmatprep.subr.bf16.mxu0 0
  %220 = vmatpush2.bf16.msra.mxu0 0
  %221 = vmatprep.subr.bf16.mxu0 0
  %222 = vmatpush2.bf16.msra.mxu0 0
  %223 = vmatprep.mubr.bf16.mxu0 0
  %224 = vmatmul.mubr.bf16.gmra.mxu0 %v189
  %v225 = vpop.f32.mrf.mxu0
  %v226 = vadd.f32 %v174, %v225
  %v227 = vpop.f32.mrf.mxu0
  %v228 = vpop.f32.mrf.mxu0
  %v229 = vpop.f32.mrf.mxu0
  %230 = vdwg.mxu0
  %231 = vst [vmem:[%s7] sm:$0xff] %v226
  // Predicated region
  $region30: #{discriminator_forward.1} parent=0 // pred_check
    _
  $region31: #{discriminator_forward.1} parent=0 // pred_check_branch
    %233 = sbr.rel (0) target = $region33
  $region32: #{discriminator_forward.1} parent=0 // pred_region
    _
  $region33: #{discriminator_forward.1} parent=0 // pred_fallthru
    _
  // Predicated region
  $region34: #{discriminator_forward.1} parent=0 // pred_check
    _
  $region35: #{discriminator_forward.1} parent=0 // pred_check_branch
    %235 = sbr.rel (0) target = $region37
  $region36: #{discriminator_forward.1} parent=0 // pred_region
    _
  $region37: #{discriminator_forward.1} parent=0 // pred_fallthru
    _

</llo_original>
